<compile_context>
chip_gen: v5e
topology: v5e:2x2
jax: 0.10.0
libtpu: 0.0.40
codegen_flags: <defaults>
</compile_context>

<pallas_src>
import jax
import jax.numpy as jnp
from jax import lax
from jax.experimental import pallas as pl
from jax.experimental.pallas import tpu as pltpu

_CHUNK = 128  # lane-chunk width of the two-level gather (one vreg of lanes)


def _rel_pos_bias_kernel(idx_ref, thi_ref, tlo_ref, out_ref):
    """out[h, t] = table[idx[t], h] via a chunked one-hot bf16 MXU matmul.

    idx_ref : (1, TL2)  int32     lane-major tile of flattened rel-pos indices
    thi_ref : (P*H, C)  bfloat16  hi part of repacked table: row p*H + h, col q
                                  holds bf16(table[p*C + q, h])
    tlo_ref : (P*H, C)  bfloat16  lo (residual) part, same packing
    out_ref : (H, TL2)  float32   lane-dense output tile
    """
    idx = idx_ref[...]                                    # (1, TL2) int32
    C = thi_ref.shape[1]
    PH = thi_ref.shape[0]
    H = out_ref.shape[0]
    P = PH // H
    TL2 = idx.shape[1]
    shift = C.bit_length() - 1                            # C is a power of two

    b = jnp.bitwise_and(idx, C - 1)                       # within-chunk index (1, TL2)
    a = jnp.right_shift(idx, shift)                       # chunk id          (1, TL2)

    # One-hot over the within-chunk axis only: (C, TL2) instead of (D, TL2).
    iota_c = lax.broadcasted_iota(jnp.int32, (C, TL2), 0)
    onehot = (iota_c == b).astype(jnp.bfloat16)           # exact 0/1 in bf16

    # (P*H, C) @ (C, TL2) -> (P*H, TL2), native bf16 MXU path, f32 accumulate.
    # hi + lo split recovers ~f32 accuracy of the gathered values.
    m1 = (jnp.dot(thi_ref[...], onehot, preferred_element_type=jnp.float32)
          + jnp.dot(tlo_ref[...], onehot, preferred_element_type=jnp.float32))

    # Resolve the chunk id with a short static select chain (P = ceil(D/128)).
    acc = m1[0:H, :]
    for p in range(1, P):
        acc = jnp.where(a == p, m1[p * H:(p + 1) * H, :], acc)
    out_ref[...] = acc.astype(out_ref.dtype)


def _round_up(x, m):
    return ((x + m - 1) // m) * m


def make_relative_position_index(window_size):
    """Mirrors the PyTorch buffer construction in __init__ (plain-JAX glue)."""
    Wh, Ww = window_size
    num_rel_dist = (2 * Wh - 1) * (2 * Ww - 1) + 3
    coords_h = jnp.arange(Wh)
    coords_w = jnp.arange(Ww)
    coords = jnp.stack(jnp.meshgrid(coords_h, coords_w, indexing="ij"))  # (2, Wh, Ww)
    coords_flatten = coords.reshape(2, -1)                               # (2, N)
    relative_coords = coords_flatten[:, :, None] - coords_flatten[:, None, :]
    relative_coords = jnp.transpose(relative_coords, (1, 2, 0))          # (N, N, 2)
    relative_coords = relative_coords.at[:, :, 0].add(Wh - 1)
    relative_coords = relative_coords.at[:, :, 1].add(Ww - 1)
    relative_coords = relative_coords.at[:, :, 0].multiply(2 * Ww - 1)
    N = Wh * Ww
    rel_pos_index = jnp.zeros((N + 1, N + 1), dtype=jnp.int32)
    rel_pos_index = rel_pos_index.at[1:, 1:].set(relative_coords.sum(-1).astype(jnp.int32))
    rel_pos_index = rel_pos_index.at[0, :].set(num_rel_dist - 3)
    rel_pos_index = rel_pos_index.at[:, 0].set(num_rel_dist - 2)
    rel_pos_index = rel_pos_index.at[0, 0].set(num_rel_dist - 1)
    return rel_pos_index, num_rel_dist


def relative_position_bias(table, rel_pos_index, window_size, num_heads,
                           *, max_tile=8192):
    """Forward pass: returns (num_heads, L, L), L = Wh*Ww + 1."""
    Wh, Ww = window_size
    L = Wh * Ww + 1
    L2 = L * L
    D = table.shape[0]
    H = num_heads
    C = _CHUNK
    P = -(-D // C)                                        # ceil(D / C)
    D_pad = P * C

    # Repack the (D, H) table into (P*H, C): row p*H + h, column q holds
    # table[p*C + q, h].  Done once in plain JAX (tiny array), plus the hi/lo
    # bf16 split used for near-f32-exact gather on the bf16 MXU path.
    t_f32 = table.astype(jnp.float32)
    t_pad = jnp.zeros((D_pad, H), jnp.float32).at[:D, :].set(t_f32)
    t_packed = jnp.transpose(t_pad.reshape(P, C, H), (0, 2, 1)).reshape(P * H, C)
    t_hi = t_packed.astype(jnp.bfloat16)
    t_lo = (t_packed - t_hi.astype(jnp.float32)).astype(jnp.bfloat16)

    # Tile the flattened L*L axis.  Per-lane-column VMEM cost (int32 iota, bool
    # mask, bf16 one-hot, m1 temporaries, double-buffered output) drives the cap
    # so the per-step working set stays well under ~24 MB on every generation
    # (v7x: 64 MiB physical VMEM; v5e needs vmem_limit_bytes > its 16 MiB default).
    bytes_per_col = C * (4 + 1 + 2) + 3 * (P * H) * 4 + 2 * H * 4
    budget = 24 * 1024 * 1024
    tl2_cap = max(128, (budget // bytes_per_col) // 128 * 128)
    TL2 = min(_round_up(L2, 128), max_tile, tl2_cap)
    num_tiles = (L2 + TL2 - 1) // TL2
    L2_pad = num_tiles * TL2

    # Lane-major index, zero-padded (index 0 is valid; padded lanes are sliced off).
    idx_flat = rel_pos_index.reshape(-1).astype(jnp.int32)
    idx_lane = jnp.zeros((1, L2_pad), jnp.int32).at[0, :L2].set(idx_flat)

    cost = pl.CostEstimate(
        flops=2 * 2 * (P * H) * C * L2_pad,
        transcendentals=0,
        bytes_accessed=idx_lane.size * 4 + 2 * t_hi.size * 2 + H * L2_pad * 4,
    )

    bias_hl2 = pl.pallas_call(
        _rel_pos_bias_kernel,
        out_shape=jax.ShapeDtypeStruct((H, L2_pad), jnp.float32),
        grid_spec=pltpu.PrefetchScalarGridSpec(
            num_scalar_prefetch=0,
            grid=(num_tiles,),
            in_specs=[
                pl.BlockSpec((1, TL2), lambda i: (0, i)),        # idx tile (lane-major)
                pl.BlockSpec((P * H, C), lambda i: (0, 0)),      # table hi (constant)
                pl.BlockSpec((P * H, C), lambda i: (0, 0)),      # table lo (constant)
            ],
            out_specs=pl.BlockSpec((H, TL2), lambda i: (0, i)),  # lane-dense output
        ),
        compiler_params=pltpu.CompilerParams(
            # TODO(synk): on v7x, pltpu.CORE_PARALLEL on this axis (with an even
            # tile count) would split the L2 loop across both TensorCores; kept
            # "parallel" here for portability to single-TC v5e/v6e.
            dimension_semantics=("parallel",),
            vmem_limit_bytes=48 * 1024 * 1024,
        ),
        cost_estimate=cost,
    )(idx_lane, t_hi, t_lo)

    # Lane-dense output: strip lane padding, then (H, L2) -> (H, L, L) is free.
    return bias_hl2[:, :L2].reshape(H, L, L)


if __name__ == "__main__":
    def reference(table, rel_pos_index, window_size, num_heads):
        Wh, Ww = window_size
        L = Wh * Ww + 1
        return jnp.transpose(
            table[rel_pos_index.reshape(-1)].reshape(L, L, num_heads), (2, 0, 1))

    key = jax.random.PRNGKey(0)
    k0, k1 = jax.random.split(key)

    # Config 1: small 4x4 window, 8 heads (single chunk, single tile).
    window_size, num_heads = (4, 4), 8
    rel_pos_index, num_rel_dist = make_relative_position_index(window_size)
    table = 0.02 * jax.random.normal(k0, (num_rel_dist, num_heads), dtype=jnp.float32)
    out = relative_position_bias(table, rel_pos_index, window_size, num_heads)
    out = jax.block_until_ready(out)
    L = window_size[0] * window_size[1] + 1
    ref = reference(table, rel_pos_index, window_size, num_heads)
    assert out.shape == (num_heads, L, L)
    assert jnp.allclose(out, ref, atol=1e-5), float(jnp.max(jnp.abs(out - ref)))

    # Config 2: 8x8 window exercises the multi-chunk (D > 128) select chain and
    # the multi-tile grid / lane-padding path (max_tile forced small).
    window_size2, num_heads2 = (8, 8), 8
    rel_pos_index2, num_rel_dist2 = make_relative_position_index(window_size2)
    table2 = 0.02 * jax.random.normal(k1, (num_rel_dist2, num_heads2), dtype=jnp.float32)
    out2 = relative_position_bias(table2, rel_pos_index2, window_size2, num_heads2,
                                  max_tile=2048)
    out2 = jax.block_until_ready(out2)
    L2_ = window_size2[0] * window_size2[1] + 1
    ref2 = reference(table2, rel_pos_index2, window_size2, num_heads2)
    assert out2.shape == (num_heads2, L2_, L2_)
    assert jnp.allclose(out2, ref2, atol=1e-5), float(jnp.max(jnp.abs(out2 - ref2)))

    print("KERNEL_OK")
</pallas_src>

<mosaic_0001>
module attributes {stable_mosaic.version = 11 : i64} {
  func.func @_rel_pos_bias_kernel(%arg0: i32, %arg1: memref<1x384xi32, #tpu.memory_space<vmem>>, %arg2: memref<8x128xbf16, #tpu.memory_space<vmem>>, %arg3: memref<8x128xbf16, #tpu.memory_space<vmem>>, %arg4: memref<8x384xf32, #tpu.memory_space<vmem>>) attributes {dimension_semantics = [#tpu.dimension_semantics<parallel>], iteration_bounds = array<i64: 1>, scalar_prefetch = 0 : i64, scratch_operands = 0 : i64, tpu.core_type = #tpu.core_type<tc>, window_params = [{transform_indices = @transform_0, window_bounds = array<i64: 1, 384>}, {pipeline_mode = #tpu.pipeline_mode<synchronous>, transform_indices = @transform_1, window_bounds = array<i64: 8, 128>}, {pipeline_mode = #tpu.pipeline_mode<synchronous>, transform_indices = @transform_2, window_bounds = array<i64: 8, 128>}, {transform_indices = @transform_3, window_bounds = array<i64: 8, 384>}]} {
    %c0 = arith.constant 0 : index
    %c0_0 = arith.constant 0 : index
    %0 = vector.load %arg1[%c0, %c0_0] : memref<1x384xi32, #tpu.memory_space<vmem>>, vector<1x384xi32>
    %c127_i32 = arith.constant 127 : i32
    %1 = vector.broadcast %c127_i32 : i32 to vector<1x384xi32>
    %2 = arith.andi %0, %1 : vector<1x384xi32>
    %3 = tpu.iota {dimensions = array<i32: 0>} : vector<128x384xi32>
    %4 = vector.broadcast %2 : vector<1x384xi32> to vector<128x384xi32>
    %5 = arith.cmpi eq, %3, %4 : vector<128x384xi32>
    %6 = arith.extui %5 : vector<128x384xi1> to vector<128x384xi32>
    %7 = arith.sitofp %6 : vector<128x384xi32> to vector<128x384xf32>
    %8 = arith.truncf %7 : vector<128x384xf32> to vector<128x384xbf16>
    %c0_1 = arith.constant 0 : index
    %c0_2 = arith.constant 0 : index
    %9 = vector.load %arg2[%c0_1, %c0_2] : memref<8x128xbf16, #tpu.memory_space<vmem>>, vector<8x128xbf16>
    %cst = arith.constant dense<0.000000e+00> : vector<8x384xf32>
    %10 = tpu.matmul %9, %8, %cst {dimension_numbers = #tpu.dot_dimension_numbers<[1], [0], [0], [1], [0, 0, 1, 1], [], []>} : vector<8x128xbf16>, vector<128x384xbf16>, vector<8x384xf32> -> vector<8x384xf32>
    %c0_3 = arith.constant 0 : index
    %c0_4 = arith.constant 0 : index
    %11 = vector.load %arg3[%c0_3, %c0_4] : memref<8x128xbf16, #tpu.memory_space<vmem>>, vector<8x128xbf16>
    %cst_5 = arith.constant dense<0.000000e+00> : vector<8x384xf32>
    %12 = tpu.matmul %11, %8, %cst_5 {dimension_numbers = #tpu.dot_dimension_numbers<[1], [0], [0], [1], [0, 0, 1, 1], [], []>} : vector<8x128xbf16>, vector<128x384xbf16>, vector<8x384xf32> -> vector<8x384xf32>
    %13 = arith.addf %10, %12 : vector<8x384xf32>
    %c0_6 = arith.constant 0 : index
    %c0_7 = arith.constant 0 : index
    %14 = vector.load %arg4[%c0_6, %c0_7] : memref<8x384xf32, #tpu.memory_space<vmem>>, vector<8x384xf32>
    tpu.vector_store %arg4[%c0_6, %c0_7], %13 {strides = array<i32>} : memref<8x384xf32, #tpu.memory_space<vmem>>, vector<8x384xf32>,
    return
  }
  func.func @transform_0(%arg0: i32) -> (i32, i32) {
    %c0_i32 = arith.constant 0 : i32
    %c0_i32_0 = arith.constant 0 : i32
    return %c0_i32, %arg0 : i32, i32
  }
  func.func @transform_1(%arg0: i32) -> (i32, i32) {
    %c0_i32 = arith.constant 0 : i32
    %c0_i32_0 = arith.constant 0 : i32
    %c0_i32_1 = arith.constant 0 : i32
    return %c0_i32, %c0_i32_0 : i32, i32
  }
  func.func @transform_2(%arg0: i32) -> (i32, i32) {
    %c0_i32 = arith.constant 0 : i32
    %c0_i32_0 = arith.constant 0 : i32
    %c0_i32_1 = arith.constant 0 : i32
    return %c0_i32, %c0_i32_0 : i32, i32
  }
  func.func @transform_3(%arg0: i32) -> (i32, i32) {
    %c0_i32 = arith.constant 0 : i32
    %c0_i32_0 = arith.constant 0 : i32
    return %c0_i32, %arg0 : i32, i32
  }
}

</mosaic_0001>

<llo_original>
// kernel: tpu_custom_call.1
$region0: #{tpu_custom_call.1}
  #allocation0 [shape = 'u32[]', space=smem, size = 0x4, offset = 0x4, fixed_abs, tag = 'smem constant byte address 0x4 - core index']
  #allocation1 [shape = 'u32[72,128]{1,0:T(1,128)}', space=vmem, size = 0x9000, scoped, tag = 'internal scratch']
  %s0 = inlined_call_operand.hbm [shape: s32[1,384], index: 0, kind: input, shape index: {}]
  %s1 = inlined_call_operand.hbm [shape: bf16[8,128], index: 1, kind: input, shape index: {}]
  %s2 = inlined_call_operand.hbm [shape: bf16[8,128], index: 2, kind: input, shape index: {}]
  %s3 = inlined_call_operand.hbm [shape: f32[8,384], index: 3, kind: output, shape index: {}]
  %s4 = sld [smem:[#allocation0]]
  $region34: #{tpu_custom_call.1} parent=0
    _
  %s6 = ssub.s32 1, %s4
  %s7 = scalar_select 0, %s6, %s4
  $region1: #{tpu_custom_call.1} parent=0
    #allocation2 [shape = 'u8[1536]{0}', space=vmem, size = 0x800, scoped, tag = 'input window, operand 0, single buffered']
    #allocation3 [shape = 's32[1]{0}', space=sflag, size = 0x4, scoped, tag = 'scoped memory for tpu_custom_call.1']
    #allocation4 [shape = 's32[1]{0}', space=sflag, size = 0x4, scoped, tag = 'scoped memory for tpu_custom_call.1']
    #allocation5 [shape = 'u8[2048]{0}', space=vmem, size = 0x800, scoped, tag = 'input window, operand 1, single buffered']
    #allocation6 [shape = 's32[1]{0}', space=sflag, size = 0x4, scoped, tag = 'scoped memory for tpu_custom_call.1']
    #allocation7 [shape = 'u8[2048]{0}', space=vmem, size = 0x800, scoped, tag = 'input window, operand 2, single buffered']
    #allocation8 [shape = 'u8[12288]{0}', space=vmem, size = 0x3000, scoped, tag = 'output window, operand 0, single buffered']
    %8 = vsyncpa [#allocation3], 0
    %9 = vsyncpa [#allocation6], 0
    %10 = vsyncpa [#allocation4], 0
    // Predicated region
    $region2: #{tpu_custom_call.1} parent=1 // pred_check
      _
    $region3: #{tpu_custom_call.1} parent=1 // pred_check_branch
      %12 = sbr.rel (0) target = $region5
    $region4: #{tpu_custom_call.1} parent=1 // pred_region
      %14 = vsyncadd [#allocation3], 0
      %s16 = sshll.u32 %s0, 4
      %s17 = int_to_ptr.hbm [resolvable:$true] %s16
      %s18 = sshll.u32 [#allocation2], 4
      %s19 = int_to_ptr.vmem [resolvable:$true] %s18
      %21 = dma.hbm_to_vmem [thread:$0]  %s17, 48, %s19, [#allocation3]
    $region5: #{tpu_custom_call.1} parent=1 // pred_fallthru
      _
    // Predicated region
    $region6: #{tpu_custom_call.1} parent=1 // pred_check
      _
    $region7: #{tpu_custom_call.1} parent=1 // pred_check_branch
      %23 = sbr.rel (0) target = $region9
    $region8: #{tpu_custom_call.1} parent=1 // pred_region
      %25 = vsyncadd [#allocation6], 0
      %s27 = sshll.u32 %s1, 4
      %s28 = int_to_ptr.hbm [resolvable:$true] %s27
      %s29 = sshll.u32 [#allocation5], 4
      %s30 = int_to_ptr.vmem [resolvable:$true] %s29
      %32 = dma.hbm_to_vmem [thread:$0]  %s28, 64, %s30, [#allocation6]
    $region9: #{tpu_custom_call.1} parent=1 // pred_fallthru
      _
    // Predicated region
    $region10: #{tpu_custom_call.1} parent=1 // pred_check
      _
    $region11: #{tpu_custom_call.1} parent=1 // pred_check_branch
      %34 = sbr.rel (0) target = $region13
    $region12: #{tpu_custom_call.1} parent=1 // pred_region
      %36 = vsyncadd [#allocation6], 0
      %s38 = sshll.u32 %s2, 4
      %s39 = int_to_ptr.hbm [resolvable:$true] %s38
      %s40 = sshll.u32 [#allocation7], 4
      %s41 = int_to_ptr.vmem [resolvable:$true] %s40
      %43 = dma.hbm_to_vmem [thread:$0]  %s39, 64, %s41, [#allocation6]
    $region13: #{tpu_custom_call.1} parent=1 // pred_fallthru
      _
    // Predicated region
    $region14: #{tpu_custom_call.1} parent=1 // pred_check
      _
    $region15: #{tpu_custom_call.1} parent=1 // pred_check_branch
      %45 = sbr.rel (0) target = $region17
    $region16: #{tpu_custom_call.1} parent=1 // pred_region
      %47 = dma.done [#allocation3], 48
    $region17: #{tpu_custom_call.1} parent=1 // pred_fallthru
      _
    // Predicated region
    $region18: #{tpu_custom_call.1} parent=1 // pred_check
      _
    $region19: #{tpu_custom_call.1} parent=1 // pred_check_branch
      %49 = sbr.rel (0) target = $region21
    $region20: #{tpu_custom_call.1} parent=1 // pred_region
      %51 = dma.done [#allocation6], 64
    $region21: #{tpu_custom_call.1} parent=1 // pred_fallthru
      _
    // Predicated region
    $region22: #{tpu_custom_call.1} parent=1 // pred_check
      _
    $region23: #{tpu_custom_call.1} parent=1 // pred_check_branch
      %53 = sbr.rel (0) target = $region25
    $region24: #{tpu_custom_call.1} parent=1 // pred_region
      %55 = dma.done [#allocation6], 64
    $region25: #{tpu_custom_call.1} parent=1 // pred_fallthru
      _
    %v56 = vld [vmem:[#allocation2] sm:$0x7]
    %v57 = vand.u32 %v56, 127
    %v58 = vlaneseq
    %v59 = vshrl.u32 %v58, 7
    %v60 = vadd.s32 %v59, 8
    %v61 = vadd.s32 %v59, 16
    %v62 = vadd.s32 %v59, 24
    %v63 = vadd.s32 %v59, 32
    %v64 = vadd.s32 %v59, 40
    %v65 = vadd.s32 %v59, 48
    %v66 = vadd.s32 %v59, 56
    %v67 = vadd.s32 %v59, 64
    %v68 = vadd.s32 %v59, 72
    %v69 = vadd.s32 %v59, 80
    %v70 = vadd.s32 %v59, 88
    %v71 = vadd.s32 %v59, 96
    %v72 = vadd.s32 %v59, 104
    %v73 = vadd.s32 %v59, 112
    %v74 = vadd.s32 %v59, 120
    %v75 = vperm.slane %v57, 0
    %v76 = vperm.slane %v57, 1
    %v77 = vperm.slane %v57, 2
    %vm78 = vcmp.eq.s32.totalorder %v59, %v75
    %vm79 = vcmp.eq.s32.totalorder %v59, %v76
    %vm80 = vcmp.eq.s32.totalorder %v59, %v77
    %vm81 = vcmp.eq.s32.totalorder %v60, %v75
    %vm82 = vcmp.eq.s32.totalorder %v60, %v76
    %vm83 = vcmp.eq.s32.totalorder %v60, %v77
    %vm84 = vcmp.eq.s32.totalorder %v61, %v75
    %vm85 = vcmp.eq.s32.totalorder %v61, %v76
    %vm86 = vcmp.eq.s32.totalorder %v61, %v77
    %vm87 = vcmp.eq.s32.totalorder %v62, %v75
    %vm88 = vcmp.eq.s32.totalorder %v62, %v76
    %vm89 = vcmp.eq.s32.totalorder %v62, %v77
    %vm90 = vcmp.eq.s32.totalorder %v63, %v75
    %vm91 = vcmp.eq.s32.totalorder %v63, %v76
    %vm92 = vcmp.eq.s32.totalorder %v63, %v77
    %vm93 = vcmp.eq.s32.totalorder %v64, %v75
    %vm94 = vcmp.eq.s32.totalorder %v64, %v76
    %vm95 = vcmp.eq.s32.totalorder %v64, %v77
    %vm96 = vcmp.eq.s32.totalorder %v65, %v75
    %vm97 = vcmp.eq.s32.totalorder %v65, %v76
    %vm98 = vcmp.eq.s32.totalorder %v65, %v77
    %vm99 = vcmp.eq.s32.totalorder %v66, %v75
    %vm100 = vcmp.eq.s32.totalorder %v66, %v76
    %vm101 = vcmp.eq.s32.totalorder %v66, %v77
    %vm102 = vcmp.eq.s32.totalorder %v67, %v75
    %vm103 = vcmp.eq.s32.totalorder %v67, %v76
    %vm104 = vcmp.eq.s32.totalorder %v67, %v77
    %vm105 = vcmp.eq.s32.totalorder %v68, %v75
    %vm106 = vcmp.eq.s32.totalorder %v68, %v76
    %vm107 = vcmp.eq.s32.totalorder %v68, %v77
    %vm108 = vcmp.eq.s32.totalorder %v69, %v75
    %vm109 = vcmp.eq.s32.totalorder %v69, %v76
    %vm110 = vcmp.eq.s32.totalorder %v69, %v77
    %vm111 = vcmp.eq.s32.totalorder %v70, %v75
    %vm112 = vcmp.eq.s32.totalorder %v70, %v76
    %vm113 = vcmp.eq.s32.totalorder %v70, %v77
    %vm114 = vcmp.eq.s32.totalorder %v71, %v75
    %vm115 = vcmp.eq.s32.totalorder %v71, %v76
    %vm116 = vcmp.eq.s32.totalorder %v71, %v77
    %vm117 = vcmp.eq.s32.totalorder %v72, %v75
    %vm118 = vcmp.eq.s32.totalorder %v72, %v76
    %vm119 = vcmp.eq.s32.totalorder %v72, %v77
    %vm120 = vcmp.eq.s32.totalorder %v73, %v75
    %vm121 = vcmp.eq.s32.totalorder %v73, %v76
    %vm122 = vcmp.eq.s32.totalorder %v73, %v77
    %vm123 = vcmp.eq.s32.totalorder %v74, %v75
    %vm124 = vcmp.eq.s32.totalorder %v74, %v76
    %vm125 = vcmp.eq.s32.totalorder %v74, %v77
    %v126 = vsel %vm78, 1, 0
    %v127 = vsel %vm79, 1, 0
    %v128 = vsel %vm80, 1, 0
    %v129 = vsel %vm81, 1, 0
    %v130 = vsel %vm82, 1, 0
    %v131 = vsel %vm83, 1, 0
    %v132 = vsel %vm84, 1, 0
    %v133 = vsel %vm85, 1, 0
    %v134 = vsel %vm86, 1, 0
    %v135 = vsel %vm87, 1, 0
    %v136 = vsel %vm88, 1, 0
    %v137 = vsel %vm89, 1, 0
    %v138 = vsel %vm90, 1, 0
    %v139 = vsel %vm91, 1, 0
    %v140 = vsel %vm92, 1, 0
    %v141 = vsel %vm93, 1, 0
    %v142 = vsel %vm94, 1, 0
    %v143 = vsel %vm95, 1, 0
    %v144 = vsel %vm96, 1, 0
    %v145 = vsel %vm97, 1, 0
    %v146 = vsel %vm98, 1, 0
    %v147 = vsel %vm99, 1, 0
    %v148 = vsel %vm100, 1, 0
    %v149 = vsel %vm101, 1, 0
    %v150 = vsel %vm102, 1, 0
    %v151 = vsel %vm103, 1, 0
    %v152 = vsel %vm104, 1, 0
    %v153 = vsel %vm105, 1, 0
    %v154 = vsel %vm106, 1, 0
    %v155 = vsel %vm107, 1, 0
    %v156 = vsel %vm108, 1, 0
    %v157 = vsel %vm109, 1, 0
    %v158 = vsel %vm110, 1, 0
    %v159 = vsel %vm111, 1, 0
    %v160 = vsel %vm112, 1, 0
    %v161 = vsel %vm113, 1, 0
    %v162 = vsel %vm114, 1, 0
    %v163 = vsel %vm115, 1, 0
    %v164 = vsel %vm116, 1, 0
    %v165 = vsel %vm117, 1, 0
    %v166 = vsel %vm118, 1, 0
    %v167 = vsel %vm119, 1, 0
    %v168 = vsel %vm120, 1, 0
    %v169 = vsel %vm121, 1, 0
    %v170 = vsel %vm122, 1, 0
    %v171 = vsel %vm123, 1, 0
    %v172 = vsel %vm124, 1, 0
    %v173 = vsel %vm125, 1, 0
    %v174 = vcvt.s32.f32 %v126
    %v175 = vcvt.s32.f32 %v127
    %v176 = vcvt.s32.f32 %v128
    %v177 = vcvt.s32.f32 %v129
    %v178 = vcvt.s32.f32 %v130
    %v179 = vcvt.s32.f32 %v131
    %v180 = vcvt.s32.f32 %v132
    %v181 = vcvt.s32.f32 %v133
    %v182 = vcvt.s32.f32 %v134
    %v183 = vcvt.s32.f32 %v135
    %v184 = vcvt.s32.f32 %v136
    %v185 = vcvt.s32.f32 %v137
    %v186 = vcvt.s32.f32 %v138
    %v187 = vcvt.s32.f32 %v139
    %v188 = vcvt.s32.f32 %v140
    %v189 = vcvt.s32.f32 %v141
    %v190 = vcvt.s32.f32 %v142
    %v191 = vcvt.s32.f32 %v143
    %v192 = vcvt.s32.f32 %v144
    %v193 = vcvt.s32.f32 %v145
    %v194 = vcvt.s32.f32 %v146
    %v195 = vcvt.s32.f32 %v147
    %v196 = vcvt.s32.f32 %v148
    %v197 = vcvt.s32.f32 %v149
    %v198 = vcvt.s32.f32 %v150
    %v199 = vcvt.s32.f32 %v151
    %v200 = vcvt.s32.f32 %v152
    %v201 = vcvt.s32.f32 %v153
    %v202 = vcvt.s32.f32 %v154
    %v203 = vcvt.s32.f32 %v155
    %v204 = vcvt.s32.f32 %v156
    %v205 = vcvt.s32.f32 %v157
    %v206 = vcvt.s32.f32 %v158
    %v207 = vcvt.s32.f32 %v159
    %v208 = vcvt.s32.f32 %v160
    %v209 = vcvt.s32.f32 %v161
    %v210 = vcvt.s32.f32 %v162
    %v211 = vcvt.s32.f32 %v163
    %v212 = vcvt.s32.f32 %v164
    %v213 = vcvt.s32.f32 %v165
    %v214 = vcvt.s32.f32 %v166
    %v215 = vcvt.s32.f32 %v167
    %v216 = vcvt.s32.f32 %v168
    %v217 = vcvt.s32.f32 %v169
    %v218 = vcvt.s32.f32 %v170
    %v219 = vcvt.s32.f32 %v171
    %v220 = vcvt.s32.f32 %v172
    %v221 = vcvt.s32.f32 %v173
    %v222 = vpack.c.bf16 %v177, %v174
    %v223 = vpack.c.bf16 %v178, %v175
    %v224 = vpack.c.bf16 %v179, %v176
    %v225 = vpack.c.bf16 %v183, %v180
    %v226 = vpack.c.bf16 %v184, %v181
    %v227 = vpack.c.bf16 %v185, %v182
    %v228 = vpack.c.bf16 %v189, %v186
    %v229 = vpack.c.bf16 %v190, %v187
    %v230 = vpack.c.bf16 %v191, %v188
    %v231 = vpack.c.bf16 %v195, %v192
    %v232 = vpack.c.bf16 %v196, %v193
    %v233 = vpack.c.bf16 %v197, %v194
    %v234 = vpack.c.bf16 %v201, %v198
    %v235 = vpack.c.bf16 %v202, %v199
    %v236 = vpack.c.bf16 %v203, %v200
    %v237 = vpack.c.bf16 %v207, %v204
    %v238 = vpack.c.bf16 %v208, %v205
    %v239 = vpack.c.bf16 %v209, %v206
    %v240 = vpack.c.bf16 %v213, %v210
    %v241 = vpack.c.bf16 %v214, %v211
    %v242 = vpack.c.bf16 %v215, %v212
    %v243 = vpack.c.bf16 %v219, %v216
    %v244 = vpack.c.bf16 %v220, %v217
    %v245 = vpack.c.bf16 %v221, %v218
    %v246 = vld [vmem:[#allocation5] sm:$0xf]
    %v247 = vld [vmem:[#allocation7] sm:$0xf]
    %248 = vmatpush.bf16.msra.mxu0 %v243
    %249 = vmatpush.bf16.msra.mxu0 %v240
    %250 = vmatpush.bf16.msra.mxu0 %v237
    %251 = vmatpush.bf16.msra.mxu0 %v234
    %252 = vmatpush.bf16.msra.mxu0 %v231
    %253 = vmatpush.bf16.msra.mxu0 %v228
    %254 = vmatpush.bf16.msra.mxu0 %v225
    %255 = vmatpush.bf16.msra.mxu0 %v222
    %256 = vmatmul.bf16.gmra.mxu0 %v247
    %v257 = vpop.f32.mrf.mxu0
    %v258 = vadd.f32 0.0, %v257
    %v259 = vpop.f32.mrf.mxu0
    %260 = vdwg.mxu0
    %261 = vmatpush.bf16.msra.mxu0 %v244
    %262 = vmatpush.bf16.msra.mxu0 %v241
    %263 = vmatpush.bf16.msra.mxu0 %v238
    %264 = vmatpush.bf16.msra.mxu0 %v235
    %265 = vmatpush.bf16.msra.mxu0 %v232
    %266 = vmatpush.bf16.msra.mxu0 %v229
    %267 = vmatpush.bf16.msra.mxu0 %v226
    %268 = vmatpush.bf16.msra.mxu0 %v223
    %269 = vmatmul.bf16.gmra.mxu0 %v247
    %v270 = vpop.f32.mrf.mxu0
    %v271 = vadd.f32 0.0, %v270
    %v272 = vpop.f32.mrf.mxu0
    %273 = vdwg.mxu0
    %274 = vmatpush.bf16.msra.mxu0 %v245
    %275 = vmatpush.bf16.msra.mxu0 %v242
    %276 = vmatpush.bf16.msra.mxu0 %v239
    %277 = vmatpush.bf16.msra.mxu0 %v236
    %278 = vmatpush.bf16.msra.mxu0 %v233
    %279 = vmatpush.bf16.msra.mxu0 %v230
    %280 = vmatpush.bf16.msra.mxu0 %v227
    %281 = vmatpush.bf16.msra.mxu0 %v224
    %282 = vmatmul.bf16.gmra.mxu0 %v247
    %v283 = vpop.f32.mrf.mxu0
    %v284 = vadd.f32 0.0, %v283
    %v285 = vpop.f32.mrf.mxu0
    %286 = vdwg.mxu0
    %287 = vmatpush.bf16.msra.mxu0 %v243
    %288 = vmatpush.bf16.msra.mxu0 %v240
    %289 = vmatpush.bf16.msra.mxu0 %v237
    %290 = vmatpush.bf16.msra.mxu0 %v234
    %291 = vmatpush.bf16.msra.mxu0 %v231
    %292 = vmatpush.bf16.msra.mxu0 %v228
    %293 = vmatpush.bf16.msra.mxu0 %v225
    %294 = vmatpush.bf16.msra.mxu0 %v222
    %295 = vmatmul.bf16.gmra.mxu0 %v246
    %v296 = vpop.f32.mrf.mxu0
    %v297 = vadd.f32 %v258, %v296
    %v298 = vpop.f32.mrf.mxu0
    %299 = vdwg.mxu0
    %300 = vmatpush.bf16.msra.mxu0 %v244
    %301 = vmatpush.bf16.msra.mxu0 %v241
    %302 = vmatpush.bf16.msra.mxu0 %v238
    %303 = vmatpush.bf16.msra.mxu0 %v235
    %304 = vmatpush.bf16.msra.mxu0 %v232
    %305 = vmatpush.bf16.msra.mxu0 %v229
    %306 = vmatpush.bf16.msra.mxu0 %v226
    %307 = vmatpush.bf16.msra.mxu0 %v223
    %308 = vmatmul.bf16.gmra.mxu0 %v246
    %v309 = vpop.f32.mrf.mxu0
    %v310 = vadd.f32 %v271, %v309
    %v311 = vpop.f32.mrf.mxu0
    %312 = vdwg.mxu0
    %313 = vmatpush.bf16.msra.mxu0 %v245
    %314 = vmatpush.bf16.msra.mxu0 %v242
    %315 = vmatpush.bf16.msra.mxu0 %v239
    %316 = vmatpush.bf16.msra.mxu0 %v236
    %317 = vmatpush.bf16.msra.mxu0 %v233
    %318 = vmatpush.bf16.msra.mxu0 %v230
    %319 = vmatpush.bf16.msra.mxu0 %v227
    %320 = vmatpush.bf16.msra.mxu0 %v224
    %321 = vmatmul.bf16.gmra.mxu0 %v246
    %v322 = vpop.f32.mrf.mxu0
    %v323 = vadd.f32 %v284, %v322
    %v324 = vpop.f32.mrf.mxu0
    %325 = vdwg.mxu0
    %326 = vst [vmem:[#allocation8] sm:$0xff] %v297
    %327 = vst [vmem:[#allocation8 + $0x8] sm:$0xff] %v310
    %328 = vst [vmem:[#allocation8 + $0x10] sm:$0xff] %v323
    // Predicated region
    $region26: #{tpu_custom_call.1} parent=1 // pred_check
      _
    $region27: #{tpu_custom_call.1} parent=1 // pred_check_branch
      %330 = sbr.rel (0) target = $region29
    $region28: #{tpu_custom_call.1} parent=1 // pred_region
      %332 = vsyncadd [#allocation4], 0
      %s334 = sshll.u32 [#allocation8], 4
      %s335 = int_to_ptr.vmem [resolvable:$true] %s334
      %s336 = sshll.u32 %s3, 4
      %s337 = int_to_ptr.hbm [resolvable:$true] %s336
      %339 = dma.vmem_to_hbm [thread:$0]  %s335, 384, %s337, [#allocation4]
    $region29: #{tpu_custom_call.1} parent=1 // pred_fallthru
      _
    // Predicated region
    $region30: #{tpu_custom_call.1} parent=1 // pred_check
      _
    $region31: #{tpu_custom_call.1} parent=1 // pred_check_branch
      %341 = sbr.rel (0) target = $region33
    $region32: #{tpu_custom_call.1} parent=1 // pred_region
      %343 = dma.done [#allocation4], 384
    $region33: #{tpu_custom_call.1} parent=1 // pred_fallthru
      _
    %344 = vsyncpa [#allocation3], 1
    %345 = vsyncpa [#allocation6], 1
    %346 = vsyncpa [#allocation4], 1

</llo_original>
